<compile_context>
chip_gen: v6e
topology: v6e:2x2x1
jax: 0.10.0
libtpu: 0.0.40
codegen_flags: <defaults>
</compile_context>

<pallas_src>
import jax
import jax.numpy as jnp
from jax.experimental import pallas as pl
from jax.experimental.pallas import tpu as pltpu

_LANE = 128       # TPU lane width (last-dim alignment target)
_SUBLANE = 8      # f32 sublane multiple for batch tiles
_NEG = -1e30      # "masked" bias for padded softmax columns


def _round_up(v, m):
    return ((v + m - 1) // m) * m


def _softmax_last(logits):
    # Numerically-stable softmax over the last (feature) axis == torch dim=1.
    # Exact division: approx reciprocal error compounds across the 3 cascaded
    # stages (t feeds m feeds a), so we keep it exact everywhere.
    mx = jnp.max(logits, axis=-1, keepdims=True)
    e = jnp.exp(logits - mx)
    return e / jnp.sum(e, axis=-1, keepdims=True)


def _make_causal_kernel(tc_p, mc_p, ac_p):
    def causal_kernel(x_ref, wx_ref, b_ref, wt2_ref, wam_ref, t_ref, m_ref, a_ref):
        # x_ref  : (tb, K)               activation tile
        # wx_ref : (K, tc_p+mc_p+ac_p)   [wt | wm_x | wa_x]  (padded, resident)
        # b_ref  : (1, tc_p+mc_p+ac_p)   [bt | bm | ba], padded cols = -1e30
        # wt2_ref: (tc_p, mc_p+ac_p)     [wm_t | wa_t]
        # wam_ref: (mc_p, ac_p)          wa_m
        # outputs: three lane-dense tiles (tb, *_p)
        x = x_ref[...]

        # One wide MXU call for every x-projection; bias add is a free VPU vadd.
        logits = jnp.dot(x, wx_ref[...], preferred_element_type=jnp.float32) + b_ref[...]

        # transfer_pre = softmax(Linear(input))
        t = _softmax_last(logits[:, :tc_p])
        t_ref[...] = t.astype(t_ref.dtype)

        # One MXU call for both t-projections (mechanism + antibiotic parts).
        t_proj = jnp.dot(t, wt2_ref[...], preferred_element_type=jnp.float32)

        # mechanism_pre = softmax(Linear(cat(input, transfer_pre)))
        m = _softmax_last(logits[:, tc_p:tc_p + mc_p] + t_proj[:, :mc_p])
        m_ref[...] = m.astype(m_ref.dtype)

        # antibiotic_pre = softmax(Linear(cat(input, transfer_pre, mechanism_pre)))
        a_logits = (
            logits[:, tc_p + mc_p:]
            + t_proj[:, mc_p:]
            + jnp.dot(m, wam_ref[...], preferred_element_type=jnp.float32)
        )
        a_ref[...] = _softmax_last(a_logits).astype(a_ref.dtype)

    return causal_kernel


def causal_forward(x, params, *, block_b=None):
    """x: (B, input_dim) f32. params: weights (in, out) + biases (1, out).

    Returns (transfer_pre, mechanism_pre, antibiotic_pre)."""
    B, input_dim = x.shape
    tc = params["wt"].shape[1]
    mc = params["wm_x"].shape[1]
    ac = params["wa_x"].shape[1]

    # ---- lane-pad the three output chunks to multiples of 128 --------------
    tc_p, mc_p, ac_p = (_round_up(c, _LANE) for c in (tc, mc, ac))
    N_p = tc_p + mc_p + ac_p

    def pad_w(w, rows, cols):           # zero-pad weight to (rows, cols)
        r, c = w.shape
        return jnp.pad(w, ((0, rows - r), (0, cols - c)))

    def pad_b(b, cols):                 # bias padded with -1e30 => softmax mass 0
        return jnp.pad(b, ((0, 0), (0, cols - b.shape[1])), constant_values=_NEG)

    # ---- host-side packing (layout plumbing, outside the kernel) -----------
    wx = jnp.concatenate(
        [pad_w(params["wt"], input_dim, tc_p),
         pad_w(params["wm_x"], input_dim, mc_p),
         pad_w(params["wa_x"], input_dim, ac_p)], axis=1)          # (K, N_p)
    bias = jnp.concatenate(
        [pad_b(params["bt"], tc_p),
         pad_b(params["bm"], mc_p),
         pad_b(params["ba"], ac_p)], axis=1)                       # (1, N_p)
    wt2 = jnp.concatenate(
        [pad_w(params["wm_t"], tc_p, mc_p),
         pad_w(params["wa_t"], tc_p, ac_p)], axis=1)               # (tc_p, mc_p+ac_p)
    wam = pad_w(params["wa_m"], mc_p, ac_p)                        # (mc_p, ac_p)

    # ---- batch tile: big enough to amortize grid-step overhead -------------
    if block_b is None:
        block_b = min(_round_up(B, _SUBLANE), 1024)
    else:
        block_b = min(_round_up(block_b, _SUBLANE), _round_up(B, _SUBLANE))
    grid = (pl.cdiv(B, block_b),)

    in_specs = [
        pl.BlockSpec((block_b, input_dim), lambda i: (i, 0)),   # x: batch-tiled
        pl.BlockSpec((input_dim, N_p), lambda i: (0, 0)),       # wx: resident
        pl.BlockSpec((1, N_p), lambda i: (0, 0)),               # bias: resident
        pl.BlockSpec((tc_p, mc_p + ac_p), lambda i: (0, 0)),    # wt2: resident
        pl.BlockSpec((mc_p, ac_p), lambda i: (0, 0)),           # wam: resident
    ]
    out_specs = [
        pl.BlockSpec((block_b, tc_p), lambda i: (i, 0)),
        pl.BlockSpec((block_b, mc_p), lambda i: (i, 0)),
        pl.BlockSpec((block_b, ac_p), lambda i: (i, 0)),
    ]
    out_shape = (
        jax.ShapeDtypeStruct((B, tc_p), jnp.float32),
        jax.ShapeDtypeStruct((B, mc_p), jnp.float32),
        jax.ShapeDtypeStruct((B, ac_p), jnp.float32),
    )

    # Advisory cost hint for XLA's scheduler around the custom call.
    flops = 2 * B * (input_dim * N_p + tc_p * (mc_p + ac_p) + mc_p * ac_p) + 8 * B * N_p
    transcendentals = B * N_p
    bytes_accessed = 4 * (B * input_dim + input_dim * N_p + N_p
                          + tc_p * (mc_p + ac_p) + mc_p * ac_p + B * N_p)
    cost = pl.CostEstimate(flops=flops, transcendentals=transcendentals,
                           bytes_accessed=bytes_accessed)

    t_p, m_p, a_p = pl.pallas_call(
        _make_causal_kernel(tc_p, mc_p, ac_p),
        out_shape=out_shape,
        grid=grid,
        in_specs=in_specs,
        out_specs=out_specs,
        compiler_params=pltpu.CompilerParams(
            dimension_semantics=("parallel",),
            vmem_limit_bytes=48 * 1024 * 1024,
        ),
        cost_estimate=cost,
    )(x, wx, bias, wt2, wam)

    # Strip lane padding (no-op slices when counts are already 128-aligned).
    return t_p[:, :tc], m_p[:, :mc], a_p[:, :ac]


def init_params(key, input_dim, transfer_count, mechanism_count, antibiotic_count):
    """Deterministic synthetic init. Weights are (in, out) = torch W.T."""
    ks = jax.random.split(key, 6)
    mech_in = input_dim + transfer_count
    anti_in = input_dim + transfer_count + mechanism_count

    w_t = jax.random.normal(ks[0], (input_dim, transfer_count), jnp.float32) * 0.1
    b_t = jax.random.normal(ks[1], (1, transfer_count), jnp.float32) * 0.1

    w_m = jax.random.normal(ks[2], (mech_in, mechanism_count), jnp.float32) * 0.1
    b_m = jax.random.normal(ks[3], (1, mechanism_count), jnp.float32) * 0.1

    w_a = jax.random.normal(ks[4], (anti_in, antibiotic_count), jnp.float32) * 0.1
    b_a = jax.random.normal(ks[5], (1, antibiotic_count), jnp.float32) * 0.1

    return {
        "wt": w_t, "bt": b_t,
        # mechanism weight split along the torch concat axis: [input | transfer]
        "wm_x": w_m[:input_dim], "wm_t": w_m[input_dim:], "bm": b_m,
        # antibiotic weight split: [input | transfer | mechanism]
        "wa_x": w_a[:input_dim],
        "wa_t": w_a[input_dim:input_dim + transfer_count],
        "wa_m": w_a[input_dim + transfer_count:],
        "ba": b_a,
    }


def causal_reference(x, params):
    def sm(z):
        z = z - jnp.max(z, axis=1, keepdims=True)
        e = jnp.exp(z)
        return e / jnp.sum(e, axis=1, keepdims=True)

    t = sm(x @ params["wt"] + params["bt"])
    m = sm(x @ params["wm_x"] + t @ params["wm_t"] + params["bm"])
    a = sm(x @ params["wa_x"] + t @ params["wa_t"] + m @ params["wa_m"] + params["ba"])
    return t, m, a


if __name__ == "__main__":
    key = jax.random.PRNGKey(0)
    k_x, k_p = jax.random.split(key)

    batch = 8
    input_dim = 32
    transfer_count = 8
    mechanism_count = 8
    antibiotic_count = 8

    x = jax.random.normal(k_x, (batch, input_dim), jnp.float32)
    params = init_params(k_p, input_dim, transfer_count, mechanism_count,
                         antibiotic_count)

    t, m, a = causal_forward(x, params)
    jax.block_until_ready((t, m, a))

    t_ref, m_ref, a_ref = causal_reference(x, params)
    assert jnp.allclose(t, t_ref, atol=1e-4), "transfer mismatch"
    assert jnp.allclose(m, m_ref, atol=1e-4), "mechanism mismatch"
    assert jnp.allclose(a, a_ref, atol=1e-4), "antibiotic mismatch"

    print("KERNEL_OK")
</pallas_src>

<mosaic_0001>
module attributes {stable_mosaic.version = 11 : i64} {
  func.func @causal_kernel(%arg0: i32, %arg1: memref<8x32xf32, #tpu.memory_space<vmem>>, %arg2: memref<32x384xf32, #tpu.memory_space<vmem>>, %arg3: memref<1x384xf32, #tpu.memory_space<vmem>>, %arg4: memref<128x256xf32, #tpu.memory_space<vmem>>, %arg5: memref<128x128xf32, #tpu.memory_space<vmem>>, %arg6: memref<8x128xf32, #tpu.memory_space<vmem>>, %arg7: memref<8x128xf32, #tpu.memory_space<vmem>>, %arg8: memref<8x128xf32, #tpu.memory_space<vmem>>) attributes {dimension_semantics = [#tpu.dimension_semantics<parallel>], iteration_bounds = array<i64: 1>, scalar_prefetch = 0 : i64, scratch_operands = 0 : i64, tpu.core_type = #tpu.core_type<tc>, window_params = [{transform_indices = @transform_0, window_bounds = array<i64: 8, 32>}, {pipeline_mode = #tpu.pipeline_mode<synchronous>, transform_indices = @transform_1, window_bounds = array<i64: 32, 384>}, {pipeline_mode = #tpu.pipeline_mode<synchronous>, transform_indices = @transform_2, window_bounds = array<i64: 1, 384>}, {pipeline_mode = #tpu.pipeline_mode<synchronous>, transform_indices = @transform_3, window_bounds = array<i64: 128, 256>}, {pipeline_mode = #tpu.pipeline_mode<synchronous>, transform_indices = @transform_4, window_bounds = array<i64: 128, 128>}, {transform_indices = @transform_5, window_bounds = array<i64: 8, 128>}, {transform_indices = @transform_6, window_bounds = array<i64: 8, 128>}, {transform_indices = @transform_7, window_bounds = array<i64: 8, 128>}]} {
    %c0 = arith.constant 0 : index
    %c0_0 = arith.constant 0 : index
    %0 = vector.load %arg1[%c0, %c0_0] : memref<8x32xf32, #tpu.memory_space<vmem>>, vector<8x32xf32>
    %c0_1 = arith.constant 0 : index
    %c0_2 = arith.constant 0 : index
    %1 = vector.load %arg2[%c0_1, %c0_2] : memref<32x384xf32, #tpu.memory_space<vmem>>, vector<32x384xf32>
    %cst = arith.constant dense<0.000000e+00> : vector<8x384xf32>
    %2 = tpu.matmul %0, %1, %cst {dimension_numbers = #tpu.dot_dimension_numbers<[1], [0], [0], [1], [0, 0, 1, 1], [], []>} : vector<8x32xf32>, vector<32x384xf32>, vector<8x384xf32> -> vector<8x384xf32>
    %c0_3 = arith.constant 0 : index
    %c0_4 = arith.constant 0 : index
    %3 = vector.load %arg3[%c0_3, %c0_4] : memref<1x384xf32, #tpu.memory_space<vmem>>, vector<1x384xf32>
    %4 = vector.broadcast %3 : vector<1x384xf32> to vector<8x384xf32>
    %5 = arith.addf %2, %4 : vector<8x384xf32>
    %6 = vector.extract_strided_slice %5 {offsets = [0, 0], sizes = [8, 128], strides = [1, 1]} : vector<8x384xf32> to vector<8x128xf32>
    %cst_5 = arith.constant dense<0xFF800000> : vector<8xf32>
    %7 = vector.multi_reduction <maximumf>, %6, %cst_5 [1] : vector<8x128xf32> to vector<8xf32>
    %8 = vector.shape_cast %7 : vector<8xf32> to vector<8x1xf32>
    %9 = vector.broadcast %8 : vector<8x1xf32> to vector<8x128xf32>
    %10 = arith.subf %6, %9 : vector<8x128xf32>
    %11 = math.exp %10 : vector<8x128xf32>
    %cst_6 = arith.constant dense<0.000000e+00> : vector<8xf32>
    %12 = vector.multi_reduction <add>, %11, %cst_6 [1] : vector<8x128xf32> to vector<8xf32>
    %13 = vector.shape_cast %12 : vector<8xf32> to vector<8x1xf32>
    %14 = vector.broadcast %13 : vector<8x1xf32> to vector<8x128xf32>
    %15 = arith.divf %11, %14 : vector<8x128xf32>
    %c0_7 = arith.constant 0 : index
    %c0_8 = arith.constant 0 : index
    %16 = vector.load %arg6[%c0_7, %c0_8] : memref<8x128xf32, #tpu.memory_space<vmem>>, vector<8x128xf32>
    tpu.vector_store %arg6[%c0_7, %c0_8], %15 {strides = array<i32>} : memref<8x128xf32, #tpu.memory_space<vmem>>, vector<8x128xf32>,
    %c0_9 = arith.constant 0 : index
    %c0_10 = arith.constant 0 : index
    %17 = vector.load %arg4[%c0_9, %c0_10] : memref<128x256xf32, #tpu.memory_space<vmem>>, vector<128x256xf32>
    %cst_11 = arith.constant dense<0.000000e+00> : vector<8x256xf32>
    %18 = tpu.matmul %15, %17, %cst_11 {dimension_numbers = #tpu.dot_dimension_numbers<[1], [0], [0], [1], [0, 0, 1, 1], [], []>} : vector<8x128xf32>, vector<128x256xf32>, vector<8x256xf32> -> vector<8x256xf32>
    %19 = vector.extract_strided_slice %5 {offsets = [0, 128], sizes = [8, 128], strides = [1, 1]} : vector<8x384xf32> to vector<8x128xf32>
    %20 = vector.extract_strided_slice %18 {offsets = [0, 0], sizes = [8, 128], strides = [1, 1]} : vector<8x256xf32> to vector<8x128xf32>
    %21 = arith.addf %19, %20 : vector<8x128xf32>
    %cst_12 = arith.constant dense<0xFF800000> : vector<8xf32>
    %22 = vector.multi_reduction <maximumf>, %21, %cst_12 [1] : vector<8x128xf32> to vector<8xf32>
    %23 = vector.shape_cast %22 : vector<8xf32> to vector<8x1xf32>
    %24 = vector.broadcast %23 : vector<8x1xf32> to vector<8x128xf32>
    %25 = arith.subf %21, %24 : vector<8x128xf32>
    %26 = math.exp %25 : vector<8x128xf32>
    %cst_13 = arith.constant dense<0.000000e+00> : vector<8xf32>
    %27 = vector.multi_reduction <add>, %26, %cst_13 [1] : vector<8x128xf32> to vector<8xf32>
    %28 = vector.shape_cast %27 : vector<8xf32> to vector<8x1xf32>
    %29 = vector.broadcast %28 : vector<8x1xf32> to vector<8x128xf32>
    %30 = arith.divf %26, %29 : vector<8x128xf32>
    %c0_14 = arith.constant 0 : index
    %c0_15 = arith.constant 0 : index
    %31 = vector.load %arg7[%c0_14, %c0_15] : memref<8x128xf32, #tpu.memory_space<vmem>>, vector<8x128xf32>
    tpu.vector_store %arg7[%c0_14, %c0_15], %30 {strides = array<i32>} : memref<8x128xf32, #tpu.memory_space<vmem>>, vector<8x128xf32>,
    %32 = vector.extract_strided_slice %5 {offsets = [0, 256], sizes = [8, 128], strides = [1, 1]} : vector<8x384xf32> to vector<8x128xf32>
    %33 = vector.extract_strided_slice %18 {offsets = [0, 128], sizes = [8, 128], strides = [1, 1]} : vector<8x256xf32> to vector<8x128xf32>
    %34 = arith.addf %32, %33 : vector<8x128xf32>
    %c0_16 = arith.constant 0 : index
    %c0_17 = arith.constant 0 : index
    %35 = vector.load %arg5[%c0_16, %c0_17] : memref<128x128xf32, #tpu.memory_space<vmem>>, vector<128x128xf32>
    %cst_18 = arith.constant dense<0.000000e+00> : vector<8x128xf32>
    %36 = tpu.matmul %30, %35, %cst_18 {dimension_numbers = #tpu.dot_dimension_numbers<[1], [0], [0], [1], [0, 0, 1, 1], [], []>} : vector<8x128xf32>, vector<128x128xf32>, vector<8x128xf32> -> vector<8x128xf32>
    %37 = arith.addf %34, %36 : vector<8x128xf32>
    %cst_19 = arith.constant dense<0xFF800000> : vector<8xf32>
    %38 = vector.multi_reduction <maximumf>, %37, %cst_19 [1] : vector<8x128xf32> to vector<8xf32>
    %39 = vector.shape_cast %38 : vector<8xf32> to vector<8x1xf32>
    %40 = vector.broadcast %39 : vector<8x1xf32> to vector<8x128xf32>
    %41 = arith.subf %37, %40 : vector<8x128xf32>
    %42 = math.exp %41 : vector<8x128xf32>
    %cst_20 = arith.constant dense<0.000000e+00> : vector<8xf32>
    %43 = vector.multi_reduction <add>, %42, %cst_20 [1] : vector<8x128xf32> to vector<8xf32>
    %44 = vector.shape_cast %43 : vector<8xf32> to vector<8x1xf32>
    %45 = vector.broadcast %44 : vector<8x1xf32> to vector<8x128xf32>
    %46 = arith.divf %42, %45 : vector<8x128xf32>
    %c0_21 = arith.constant 0 : index
    %c0_22 = arith.constant 0 : index
    %47 = vector.load %arg8[%c0_21, %c0_22] : memref<8x128xf32, #tpu.memory_space<vmem>>, vector<8x128xf32>
    tpu.vector_store %arg8[%c0_21, %c0_22], %46 {strides = array<i32>} : memref<8x128xf32, #tpu.memory_space<vmem>>, vector<8x128xf32>,
    return
  }
  func.func @transform_0(%arg0: i32) -> (i32, i32) {
    %c0_i32 = arith.constant 0 : i32
    %c0_i32_0 = arith.constant 0 : i32
    return %arg0, %c0_i32 : i32, i32
  }
  func.func @transform_1(%arg0: i32) -> (i32, i32) {
    %c0_i32 = arith.constant 0 : i32
    %c0_i32_0 = arith.constant 0 : i32
    %c0_i32_1 = arith.constant 0 : i32
    return %c0_i32, %c0_i32_0 : i32, i32
  }
  func.func @transform_2(%arg0: i32) -> (i32, i32) {
    %c0_i32 = arith.constant 0 : i32
    %c0_i32_0 = arith.constant 0 : i32
    %c0_i32_1 = arith.constant 0 : i32
    return %c0_i32, %c0_i32_0 : i32, i32
  }
  func.func @transform_3(%arg0: i32) -> (i32, i32) {
    %c0_i32 = arith.constant 0 : i32
    %c0_i32_0 = arith.constant 0 : i32
    %c0_i32_1 = arith.constant 0 : i32
    return %c0_i32, %c0_i32_0 : i32, i32
  }
  func.func @transform_4(%arg0: i32) -> (i32, i32) {
    %c0_i32 = arith.constant 0 : i32
    %c0_i32_0 = arith.constant 0 : i32
    %c0_i32_1 = arith.constant 0 : i32
    return %c0_i32, %c0_i32_0 : i32, i32
  }
  func.func @transform_5(%arg0: i32) -> (i32, i32) {
    %c0_i32 = arith.constant 0 : i32
    %c0_i32_0 = arith.constant 0 : i32
    return %arg0, %c0_i32 : i32, i32
  }
  func.func @transform_6(%arg0: i32) -> (i32, i32) {
    %c0_i32 = arith.constant 0 : i32
    %c0_i32_0 = arith.constant 0 : i32
    return %arg0, %c0_i32 : i32, i32
  }
  func.func @transform_7(%arg0: i32) -> (i32, i32) {
    %c0_i32 = arith.constant 0 : i32
    %c0_i32_0 = arith.constant 0 : i32
    return %arg0, %c0_i32 : i32, i32
  }
}

</mosaic_0001>

<llo_original>
// kernel: tpu_custom_call.1
$region0: #{tpu_custom_call.1}
  #allocation0 [shape = 'u32[]', space=smem, size = 0x4, offset = 0x4, fixed_abs, tag = 'smem constant byte address 0x4 - core index']
  #allocation1 [shape = 'u32[144,128]{1,0:T(1,128)}', space=vmem, size = 0x12000, scoped, tag = 'internal scratch']
  %s0 = inlined_call_operand.hbm [shape: f32[8,32], index: 0, kind: input, shape index: {}]
  %s1 = inlined_call_operand.hbm [shape: f32[32,384], index: 1, kind: input, shape index: {}]
  %s2 = inlined_call_operand.vmem [shape: f32[1,384], index: 2, kind: input, shape index: {}]
  %s3 = inlined_call_operand.hbm [shape: f32[128,256], index: 3, kind: input, shape index: {}]
  %s4 = inlined_call_operand.hbm [shape: f32[128,128], index: 4, kind: input, shape index: {}]
  %s5 = inlined_call_operand.hbm [shape: f32[8,128], index: 5, kind: output, shape index: {0}]
  %s6 = inlined_call_operand.hbm [shape: f32[8,128], index: 6, kind: output, shape index: {1}]
  %s7 = inlined_call_operand.hbm [shape: f32[8,128], index: 7, kind: output, shape index: {2}]
  %8 = xla_tuple %s5, %s6, %s7
  %s9 = sld [smem:[#allocation0]]
  $region62: #{tpu_custom_call.1} parent=0
    _
  %s11 = ssub.s32 1, %s9
  %s12 = scalar_select 0, %s11, %s9
  $region1: #{tpu_custom_call.1} parent=0
    #allocation2 [shape = 'u8[4096]{0}', space=vmem, size = 0x1000, scoped, tag = 'input window, operand 0, single buffered']
    #allocation3 [shape = 's32[1]{0}', space=sflag, size = 0x4, scoped, tag = 'scoped memory for tpu_custom_call.1']
    #allocation4 [shape = 's32[1]{0}', space=sflag, size = 0x4, scoped, tag = 'scoped memory for tpu_custom_call.1']
    #allocation5 [shape = 'u8[49152]{0}', space=vmem, size = 0xc000, scoped, tag = 'input window, operand 1, single buffered']
    #allocation6 [shape = 's32[1]{0}', space=sflag, size = 0x4, scoped, tag = 'scoped memory for tpu_custom_call.1']
    #allocation7 [shape = 'u8[131072]{0}', space=vmem, size = 0x20000, scoped, tag = 'input window, operand 3, single buffered']
    #allocation8 [shape = 'u8[65536]{0}', space=vmem, size = 0x10000, scoped, tag = 'input window, operand 4, single buffered']
    #allocation9 [shape = 's32[1]{0}', space=sflag, size = 0x4, scoped, tag = 'scoped memory for tpu_custom_call.1']
    #allocation10 [shape = 'u8[4096]{0}', space=vmem, size = 0x1000, scoped, tag = 'output window, operand 0, single buffered']
    #allocation11 [shape = 'u8[4096]{0}', space=vmem, size = 0x1000, scoped, tag = 'output window, operand 1, single buffered']
    #allocation12 [shape = 's32[1]{0}', space=sflag, size = 0x4, scoped, tag = 'scoped memory for tpu_custom_call.1']
    #allocation13 [shape = 'u8[4096]{0}', space=vmem, size = 0x1000, scoped, tag = 'output window, operand 2, single buffered']
    %13 = vsyncpa [#allocation3], 0
    %14 = vsyncpa [#allocation6], 0
    %15 = vsyncpa [#allocation9], 0
    %16 = vsyncpa [#allocation4], 0
    %17 = vsyncpa [#allocation12], 0
    // Predicated region
    $region2: #{tpu_custom_call.1} parent=1 // pred_check
      _
    $region3: #{tpu_custom_call.1} parent=1 // pred_check_branch
      %19 = sbr.rel (0) target = $region5
    $region4: #{tpu_custom_call.1} parent=1 // pred_region
      %s21 = ssub.s32 128, 128
      %22 = vsyncadd [#allocation3], %s21
      %s24 = sshll.u32 [#allocation2], 4
      %s25 = int_to_ptr.vmem [resolvable:$true] %s24
      %27 = dma.hbm_to_vmem [thread:$0]  %s0, 128, %s25, [#allocation3]
    $region5: #{tpu_custom_call.1} parent=1 // pred_fallthru
      _
    // Predicated region
    $region6: #{tpu_custom_call.1} parent=1 // pred_check
      _
    $region7: #{tpu_custom_call.1} parent=1 // pred_check_branch
      %29 = sbr.rel (0) target = $region9
    $region8: #{tpu_custom_call.1} parent=1 // pred_region
      %s31 = ssub.s32 1536, 1536
      %32 = vsyncadd [#allocation6], %s31
      %s33 = sshll.u32 [#allocation5], 4
      %s34 = int_to_ptr.vmem [resolvable:$true] %s33
      %39 = dma.hbm_to_vmem [thread:$0]  %s1, 1536, %s34, [#allocation6], 384, 384, 24
    $region9: #{tpu_custom_call.1} parent=1 // pred_fallthru
      _
    // Predicated region
    $region10: #{tpu_custom_call.1} parent=1 // pred_check
      _
    $region11: #{tpu_custom_call.1} parent=1 // pred_check_branch
      %41 = sbr.rel (0) target = $region13
    $region12: #{tpu_custom_call.1} parent=1 // pred_region
      _
    $region13: #{tpu_custom_call.1} parent=1 // pred_fallthru
      _
    // Predicated region
    $region14: #{tpu_custom_call.1} parent=1 // pred_check
      _
    $region15: #{tpu_custom_call.1} parent=1 // pred_check_branch
      %43 = sbr.rel (0) target = $region17
    $region16: #{tpu_custom_call.1} parent=1 // pred_region
      %s45 = ssub.s32 4096, 4096
      %46 = vsyncadd [#allocation6], %s45
      %s47 = sshll.u32 [#allocation7], 4
      %s48 = int_to_ptr.vmem [resolvable:$true] %s47
      %53 = dma.hbm_to_vmem [thread:$0]  %s3, 4096, %s48, [#allocation6], 256, 256, 16
    $region17: #{tpu_custom_call.1} parent=1 // pred_fallthru
      _
    // Predicated region
    $region18: #{tpu_custom_call.1} parent=1 // pred_check
      _
    $region19: #{tpu_custom_call.1} parent=1 // pred_check_branch
      %55 = sbr.rel (0) target = $region21
    $region20: #{tpu_custom_call.1} parent=1 // pred_region
      %s57 = ssub.s32 2048, 2048
      %58 = vsyncadd [#allocation9], %s57
      %s59 = sshll.u32 [#allocation8], 4
      %s60 = int_to_ptr.vmem [resolvable:$true] %s59
      %65 = dma.hbm_to_vmem [thread:$0]  %s4, 2048, %s60, [#allocation9], 128, 128, 8
    $region21: #{tpu_custom_call.1} parent=1 // pred_fallthru
      _
    // Predicated region
    $region22: #{tpu_custom_call.1} parent=1 // pred_check
      _
    $region23: #{tpu_custom_call.1} parent=1 // pred_check_branch
      %67 = sbr.rel (0) target = $region25
    $region24: #{tpu_custom_call.1} parent=1 // pred_region
      %68 = dma.done [#allocation3], 128
    $region25: #{tpu_custom_call.1} parent=1 // pred_fallthru
      _
    // Predicated region
    $region26: #{tpu_custom_call.1} parent=1 // pred_check
      _
    $region27: #{tpu_custom_call.1} parent=1 // pred_check_branch
      %70 = sbr.rel (0) target = $region29
    $region28: #{tpu_custom_call.1} parent=1 // pred_region
      %71 = dma.done [#allocation6], 1536
    $region29: #{tpu_custom_call.1} parent=1 // pred_fallthru
      _
    // Predicated region
    $region30: #{tpu_custom_call.1} parent=1 // pred_check
      _
    $region31: #{tpu_custom_call.1} parent=1 // pred_check_branch
      %73 = sbr.rel (0) target = $region33
    $region32: #{tpu_custom_call.1} parent=1 // pred_region
      %74 = dma.done [#allocation6], 4096
    $region33: #{tpu_custom_call.1} parent=1 // pred_fallthru
      _
    // Predicated region
    $region34: #{tpu_custom_call.1} parent=1 // pred_check
      _
    $region35: #{tpu_custom_call.1} parent=1 // pred_check_branch
      %76 = sbr.rel (0) target = $region37
    $region36: #{tpu_custom_call.1} parent=1 // pred_region
      %77 = dma.done [#allocation9], 2048
    $region37: #{tpu_custom_call.1} parent=1 // pred_fallthru
      _
    %v78 = vld [vmem:[#allocation2] sm:$0xff]
    %v79 = vld [vmem:[#allocation5] sm:$0xff]
    %v80 = vld [vmem:[#allocation5 + $0x8] sm:$0xff]
    %v81 = vld [vmem:[#allocation5 + $0x10] sm:$0xff]
    %v82 = vld [vmem:[#allocation5 + $0x18] sm:$0xff]
    %v83 = vld [vmem:[#allocation5 + $0x20] sm:$0xff]
    %v84 = vld [vmem:[#allocation5 + $0x28] sm:$0xff]
    %v85 = vld [vmem:[#allocation5 + $0x30] sm:$0xff]
    %v86 = vld [vmem:[#allocation5 + $0x38] sm:$0xff]
    %v87 = vld [vmem:[#allocation5 + $0x40] sm:$0xff]
    %v88 = vld [vmem:[#allocation5 + $0x48] sm:$0xff]
    %v89 = vld [vmem:[#allocation5 + $0x50] sm:$0xff]
    %v90 = vld [vmem:[#allocation5 + $0x58] sm:$0xff]
    %v91 = vld [vmem:[%s2] sm:$0x7]
    %v93 = vlaneseq
    %v94 = vshrl.u32 %v93, 7
    %v95 = vsub.s32 0, %v94
    %v96 = vrot.slane %v91, %v95
    %v97 = vlaneseq
    %v98 = vshrl.u32 %v97, 7
    %v99 = vsub.s32 1, %v98
    %v100 = vrot.slane %v91, %v99
    %v101 = vlaneseq
    %v102 = vshrl.u32 %v101, 7
    %v103 = vsub.s32 2, %v102
    %v104 = vrot.slane %v91, %v103
    %vm108 = vcmask 261120
    %v110 = vsel %vm108, %v78, 0
    %112 = vmatprep.subr.mxu0 0.0
    %113 = vmatpush1.msra.mxu0 0.0
    %114 = vmatprep.subr.mxu0 0.0
    %115 = vmatpush1.msra.mxu0 0.0
    %116 = vmatprep.subr.mxu0 0.0
    %117 = vmatpush1.msra.mxu0 0.0
    %118 = vmatprep.subr.mxu0 0.0
    %119 = vmatpush1.msra.mxu0 0.0
    %120 = vmatprep.subr.mxu0 0.0
    %121 = vmatpush1.msra.mxu0 0.0
    %122 = vmatprep.subr.mxu0 0.0
    %123 = vmatpush1.msra.mxu0 0.0
    %124 = vmatprep.subr.mxu0 0.0
    %125 = vmatpush1.msra.mxu0 0.0
    %126 = vmatprep.subr.mxu0 0.0
    %127 = vmatpush1.msra.mxu0 0.0
    %128 = vmatprep.subr.mxu0 0.0
    %129 = vmatpush1.msra.mxu0 0.0
    %130 = vmatprep.subr.mxu0 0.0
    %131 = vmatpush1.msra.mxu0 0.0
    %132 = vmatprep.subr.mxu0 0.0
    %133 = vmatpush1.msra.mxu0 0.0
    %134 = vmatprep.subr.mxu0 0.0
    %135 = vmatpush1.msra.mxu0 0.0
    %136 = vmatprep.subr.mxu0 %v89
    %137 = vmatpush1.msra.mxu0 %v88
    %138 = vmatprep.subr.mxu0 %v86
    %139 = vmatpush1.msra.mxu0 %v85
    %140 = vmatprep.subr.mxu0 %v83
    %141 = vmatpush1.msra.mxu0 %v82
    %142 = vmatprep.subr.mxu0 %v80
    %143 = vmatpush1.msra.mxu0 %v79
    %144 = vmatprep.subr.mxu0 0.0
    %145 = vmatpush2.msra.mxu0 0.0
    %146 = vmatprep.subr.mxu0 0.0
    %147 = vmatpush2.msra.mxu0 0.0
    %148 = vmatprep.subr.mxu0 0.0
    %149 = vmatpush2.msra.mxu0 0.0
    %150 = vmatprep.subr.mxu0 0.0
    %151 = vmatpush2.msra.mxu0 0.0
    %152 = vmatprep.subr.mxu0 0.0
    %153 = vmatpush2.msra.mxu0 0.0
    %154 = vmatprep.subr.mxu0 0.0
    %155 = vmatpush2.msra.mxu0 0.0
    %156 = vmatprep.subr.mxu0 0.0
    %157 = vmatpush2.msra.mxu0 0.0
    %158 = vmatprep.subr.mxu0 0.0
    %159 = vmatpush2.msra.mxu0 0.0
    %160 = vmatprep.subr.mxu0 0.0
    %161 = vmatpush2.msra.mxu0 0.0
    %162 = vmatprep.subr.mxu0 0.0
    %163 = vmatpush2.msra.mxu0 0.0
    %164 = vmatprep.subr.mxu0 0.0
    %165 = vmatpush2.msra.mxu0 0.0
    %166 = vmatprep.subr.mxu0 0.0
    %167 = vmatpush2.msra.mxu0 0.0
    %168 = vmatprep.subr.mxu0 0.0
    %169 = vmatpush2.msra.mxu0 0.0
    %170 = vmatprep.subr.mxu0 0.0
    %171 = vmatpush2.msra.mxu0 0.0
    %172 = vmatprep.subr.mxu0 0.0
    %173 = vmatpush2.msra.mxu0 0.0
    %174 = vmatprep.subr.mxu0 0.0
    %175 = vmatpush2.msra.mxu0 0.0
    %176 = vmatprep.mubr.f32.mxu0 0.0
    %177 = vmatmul.mubr.f32.gmra.mxu0 %v110
    %v178 = vpop.f32.mrf.mxu0
    %v179 = vadd.f32 %v96, %v178
    %v180 = vpop.f32.mrf.mxu0
    %v181 = vadd.f32 %v100, %v180
    %182 = vdwg.mxu0
    %183 = vmatprep.subr.mxu0 0.0
    %184 = vmatpush1.msra.mxu0 0.0
    %185 = vmatprep.subr.mxu0 0.0
    %186 = vmatpush1.msra.mxu0 0.0
    %187 = vmatprep.subr.mxu0 0.0
    %188 = vmatpush1.msra.mxu0 0.0
    %189 = vmatprep.subr.mxu0 0.0
    %190 = vmatpush1.msra.mxu0 0.0
    %191 = vmatprep.subr.mxu0 0.0
    %192 = vmatpush1.msra.mxu0 0.0
    %193 = vmatprep.subr.mxu0 0.0
    %194 = vmatpush1.msra.mxu0 0.0
    %195 = vmatprep.subr.mxu0 0.0
    %196 = vmatpush1.msra.mxu0 0.0
    %197 = vmatprep.subr.mxu0 0.0
    %198 = vmatpush1.msra.mxu0 0.0
    %199 = vmatprep.subr.mxu0 0.0
    %200 = vmatpush1.msra.mxu0 0.0
    %201 = vmatprep.subr.mxu0 0.0
    %202 = vmatpush1.msra.mxu0 0.0
    %203 = vmatprep.subr.mxu0 0.0
    %204 = vmatpush1.msra.mxu0 0.0
    %205 = vmatprep.subr.mxu0 0.0
    %206 = vmatpush1.msra.mxu0 0.0
    %207 = vmatprep.subr.mxu0 0.0
    %208 = vmatpush1.msra.mxu0 %v90
    %209 = vmatprep.subr.mxu0 0.0
    %210 = vmatpush1.msra.mxu0 %v87
    %211 = vmatprep.subr.mxu0 0.0
    %212 = vmatpush1.msra.mxu0 %v84
    %213 = vmatprep.subr.mxu0 0.0
    %214 = vmatpush1.msra.mxu0 %v81
    %215 = vmatprep.subr.mxu0 0.0
    %216 = vmatpush2.msra.mxu0 0.0
    %217 = vmatprep.subr.mxu0 0.0
    %218 = vmatpush2.msra.mxu0 0.0
    %219 = vmatprep.subr.mxu0 0.0
    %220 = vmatpush2.msra.mxu0 0.0
    %221 = vmatprep.subr.mxu0 0.0
    %222 = vmatpush2.msra.mxu0 0.0
    %223 = vmatprep.subr.mxu0 0.0
    %224 = vmatpush2.msra.mxu0 0.0
    %225 = vmatprep.subr.mxu0 0.0
    %226 = vmatpush2.msra.mxu0 0.0
    %227 = vmatprep.subr.mxu0 0.0
    %228 = vmatpush2.msra.mxu0 0.0
    %229 = vmatprep.subr.mxu0 0.0
    %230 = vmatpush2.msra.mxu0 0.0
    %231 = vmatprep.subr.mxu0 0.0
    %232 = vmatpush2.msra.mxu0 0.0
    %233 = vmatprep.subr.mxu0 0.0
    %234 = vmatpush2.msra.mxu0 0.0
    %235 = vmatprep.subr.mxu0 0.0
    %236 = vmatpush2.msra.mxu0 0.0
    %237 = vmatprep.subr.mxu0 0.0
    %238 = vmatpush2.msra.mxu0 0.0
    %239 = vmatprep.subr.mxu0 0.0
    %240 = vmatpush2.msra.mxu0 0.0
    %241 = vmatprep.subr.mxu0 0.0
    %242 = vmatpush2.msra.mxu0 0.0
    %243 = vmatprep.subr.mxu0 0.0
    %244 = vmatpush2.msra.mxu0 0.0
    %245 = vmatprep.subr.mxu0 0.0
    %246 = vmatpush2.msra.mxu0 0.0
    %247 = vmatprep.mubr.f32.mxu0 0.0
    %248 = vmatmul.mubr.f32.gmra.mxu0 %v110
    %v249 = vpop.f32.mrf.mxu0
    %v250 = vadd.f32 %v104, %v249
    %v251 = vpop.f32.mrf.mxu0
    %252 = vdwg.mxu0
    %253 = vmax.xlane.f32.xlu0 %v179
    %v254 = vpop.xlane.xlu0 %253
    %v255 = vsub.f32 %v179, %v254
    %v256 = vmul.f32 %v255, 1.442695
    %v257 = vpow.pop %v256
    %258 = vadd.xlane.f32.xlu0 %v257
    %v259 = vpop.xlane.xlu0 %258
    %v260 = vrcp.pop %v259
    %v261 = vmul.f32 %v257, %v260
    %262 = vst [vmem:[#allocation10] sm:$0xff] %v261
    %v263 = vld [vmem:[#allocation7] sm:$0xff]
    %v264 = vld [vmem:[#allocation7 + $0x8] sm:$0xff]
    %v265 = vld [vmem:[#allocation7 + $0x10] sm:$0xff]
    %v266 = vld [vmem:[#allocation7 + $0x18] sm:$0xff]
    %v267 = vld [vmem:[#allocation7 + $0x20] sm:$0xff]
    %v268 = vld [vmem:[#allocation7 + $0x28] sm:$0xff]
    %v269 = vld [vmem:[#allocation7 + $0x30] sm:$0xff]
    %v270 = vld [vmem:[#allocation7 + $0x38] sm:$0xff]
    %v271 = vld [vmem:[#allocation7 + $0x40] sm:$0xff]
    %v272 = vld [vmem:[#allocation7 + $0x48] sm:$0xff]
    %v273 = vld [vmem:[#allocation7 + $0x50] sm:$0xff]
    %v274 = vld [vmem:[#allocation7 + $0x58] sm:$0xff]
    %v275 = vld [vmem:[#allocation7 + $0x60] sm:$0xff]
    %v276 = vld [vmem:[#allocation7 + $0x68] sm:$0xff]
    %v277 = vld [vmem:[#allocation7 + $0x70] sm:$0xff]
    %v278 = vld [vmem:[#allocation7 + $0x78] sm:$0xff]
    %v279 = vld [vmem:[#allocation7 + $0x80] sm:$0xff]
    %v280 = vld [vmem:[#allocation7 + $0x88] sm:$0xff]
    %v281 = vld [vmem:[#allocation7 + $0x90] sm:$0xff]
    %v282 = vld [vmem:[#allocation7 + $0x98] sm:$0xff]
    %v283 = vld [vmem:[#allocation7 + $0xa0] sm:$0xff]
    %v284 = vld [vmem:[#allocation7 + $0xa8] sm:$0xff]
    %v285 = vld [vmem:[#allocation7 + $0xb0] sm:$0xff]
    %v286 = vld [vmem:[#allocation7 + $0xb8] sm:$0xff]
    %v287 = vld [vmem:[#allocation7 + $0xc0] sm:$0xff]
    %v288 = vld [vmem:[#allocation7 + $0xc8] sm:$0xff]
    %v289 = vld [vmem:[#allocation7 + $0xd0] sm:$0xff]
    %v290 = vld [vmem:[#allocation7 + $0xd8] sm:$0xff]
    %v291 = vld [vmem:[#allocation7 + $0xe0] sm:$0xff]
    %v292 = vld [vmem:[#allocation7 + $0xe8] sm:$0xff]
    %v293 = vld [vmem:[#allocation7 + $0xf0] sm:$0xff]
    %v294 = vld [vmem:[#allocation7 + $0xf8] sm:$0xff]
    %295 = vmatprep.subr.mxu0 %v294
    %296 = vmatpush1.msra.mxu0 %v293
    %297 = vmatprep.subr.mxu0 %v292
    %298 = vmatpush1.msra.mxu0 %v291
    %299 = vmatprep.subr.mxu0 %v290
    %300 = vmatpush1.msra.mxu0 %v289
    %301 = vmatprep.subr.mxu0 %v288
    %302 = vmatpush1.msra.mxu0 %v287
    %303 = vmatprep.subr.mxu0 %v286
    %304 = vmatpush1.msra.mxu0 %v285
    %305 = vmatprep.subr.mxu0 %v284
    %306 = vmatpush1.msra.mxu0 %v283
    %307 = vmatprep.subr.mxu0 %v282
    %308 = vmatpush1.msra.mxu0 %v281
    %309 = vmatprep.subr.mxu0 %v280
    %310 = vmatpush1.msra.mxu0 %v279
    %311 = vmatprep.subr.mxu0 %v278
    %312 = vmatpush1.msra.mxu0 %v277
    %313 = vmatprep.subr.mxu0 %v276
    %314 = vmatpush1.msra.mxu0 %v275
    %315 = vmatprep.subr.mxu0 %v274
    %316 = vmatpush1.msra.mxu0 %v273
    %317 = vmatprep.subr.mxu0 %v272
    %318 = vmatpush1.msra.mxu0 %v271
    %319 = vmatprep.subr.mxu0 %v270
    %320 = vmatpush1.msra.mxu0 %v269
    %321 = vmatprep.subr.mxu0 %v268
    %322 = vmatpush1.msra.mxu0 %v267
    %323 = vmatprep.subr.mxu0 %v266
    %324 = vmatpush1.msra.mxu0 %v265
    %325 = vmatprep.subr.mxu0 %v264
    %326 = vmatpush1.msra.mxu0 %v263
    %327 = vmatprep.subr.mxu0 0.0
    %328 = vmatpush2.msra.mxu0 0.0
    %329 = vmatprep.subr.mxu0 0.0
    %330 = vmatpush2.msra.mxu0 0.0
    %331 = vmatprep.subr.mxu0 0.0
    %332 = vmatpush2.msra.mxu0 0.0
    %333 = vmatprep.subr.mxu0 0.0
    %334 = vmatpush2.msra.mxu0 0.0
    %335 = vmatprep.subr.mxu0 0.0
    %336 = vmatpush2.msra.mxu0 0.0
    %337 = vmatprep.subr.mxu0 0.0
    %338 = vmatpush2.msra.mxu0 0.0
    %339 = vmatprep.subr.mxu0 0.0
    %340 = vmatpush2.msra.mxu0 0.0
    %341 = vmatprep.subr.mxu0 0.0
    %342 = vmatpush2.msra.mxu0 0.0
    %343 = vmatprep.subr.mxu0 0.0
    %344 = vmatpush2.msra.mxu0 0.0
    %345 = vmatprep.subr.mxu0 0.0
    %346 = vmatpush2.msra.mxu0 0.0
    %347 = vmatprep.subr.mxu0 0.0
    %348 = vmatpush2.msra.mxu0 0.0
    %349 = vmatprep.subr.mxu0 0.0
    %350 = vmatpush2.msra.mxu0 0.0
    %351 = vmatprep.subr.mxu0 0.0
    %352 = vmatpush2.msra.mxu0 0.0
    %353 = vmatprep.subr.mxu0 0.0
    %354 = vmatpush2.msra.mxu0 0.0
    %355 = vmatprep.subr.mxu0 0.0
    %356 = vmatpush2.msra.mxu0 0.0
    %357 = vmatprep.subr.mxu0 0.0
    %358 = vmatpush2.msra.mxu0 0.0
    %359 = vmatprep.mubr.f32.mxu0 0.0
    %360 = vmatmul.mubr.f32.gmra.mxu0 %v261
    %v361 = vpop.f32.mrf.mxu0
    %v362 = vadd.f32 0.0, %v361
    %v363 = vpop.f32.mrf.mxu0
    %v364 = vadd.f32 0.0, %v363
    %365 = vdwg.mxu0
    %v366 = vadd.f32 %v181, %v362
    %367 = vmax.xlane.f32.xlu0 %v366
    %v368 = vpop.xlane.xlu0 %367
    %v369 = vsub.f32 %v366, %v368
    %v370 = vmul.f32 %v369, 1.442695
    %v371 = vpow.pop %v370
    %372 = vadd.xlane.f32.xlu0 %v371
    %v373 = vpop.xlane.xlu0 %372
    %v374 = vrcp.pop %v373
    %v375 = vmul.f32 %v371, %v374
    %376 = vst [vmem:[#allocation11] sm:$0xff] %v375
    %v377 = vadd.f32 %v250, %v364
    %v378 = vld [vmem:[#allocation8] sm:$0xff]
    %v379 = vld [vmem:[#allocation8 + $0x8] sm:$0xff]
    %v380 = vld [vmem:[#allocation8 + $0x10] sm:$0xff]
    %v381 = vld [vmem:[#allocation8 + $0x18] sm:$0xff]
    %v382 = vld [vmem:[#allocation8 + $0x20] sm:$0xff]
    %v383 = vld [vmem:[#allocation8 + $0x28] sm:$0xff]
    %v384 = vld [vmem:[#allocation8 + $0x30] sm:$0xff]
    %v385 = vld [vmem:[#allocation8 + $0x38] sm:$0xff]
    %v386 = vld [vmem:[#allocation8 + $0x40] sm:$0xff]
    %v387 = vld [vmem:[#allocation8 + $0x48] sm:$0xff]
    %v388 = vld [vmem:[#allocation8 + $0x50] sm:$0xff]
    %v389 = vld [vmem:[#allocation8 + $0x58] sm:$0xff]
    %v390 = vld [vmem:[#allocation8 + $0x60] sm:$0xff]
    %v391 = vld [vmem:[#allocation8 + $0x68] sm:$0xff]
    %v392 = vld [vmem:[#allocation8 + $0x70] sm:$0xff]
    %v393 = vld [vmem:[#allocation8 + $0x78] sm:$0xff]
    %394 = vmatprep.subr.mxu0 0.0
    %395 = vmatpush1.msra.mxu0 %v393
    %396 = vmatprep.subr.mxu0 0.0
    %397 = vmatpush1.msra.mxu0 %v392
    %398 = vmatprep.subr.mxu0 0.0
    %399 = vmatpush1.msra.mxu0 %v391
    %400 = vmatprep.subr.mxu0 0.0
    %401 = vmatpush1.msra.mxu0 %v390
    %402 = vmatprep.subr.mxu0 0.0
    %403 = vmatpush1.msra.mxu0 %v389
    %404 = vmatprep.subr.mxu0 0.0
    %405 = vmatpush1.msra.mxu0 %v388
    %406 = vmatprep.subr.mxu0 0.0
    %407 = vmatpush1.msra.mxu0 %v387
    %408 = vmatprep.subr.mxu0 0.0
    %409 = vmatpush1.msra.mxu0 %v386
    %410 = vmatprep.subr.mxu0 0.0
    %411 = vmatpush1.msra.mxu0 %v385
    %412 = vmatprep.subr.mxu0 0.0
    %413 = vmatpush1.msra.mxu0 %v384
    %414 = vmatprep.subr.mxu0 0.0
    %415 = vmatpush1.msra.mxu0 %v383
    %416 = vmatprep.subr.mxu0 0.0
    %417 = vmatpush1.msra.mxu0 %v382
    %418 = vmatprep.subr.mxu0 0.0
    %419 = vmatpush1.msra.mxu0 %v381
    %420 = vmatprep.subr.mxu0 0.0
    %421 = vmatpush1.msra.mxu0 %v380
    %422 = vmatprep.subr.mxu0 0.0
    %423 = vmatpush1.msra.mxu0 %v379
    %424 = vmatprep.subr.mxu0 0.0
    %425 = vmatpush1.msra.mxu0 %v378
    %426 = vmatprep.subr.mxu0 0.0
    %427 = vmatpush2.msra.mxu0 0.0
    %428 = vmatprep.subr.mxu0 0.0
    %429 = vmatpush2.msra.mxu0 0.0
    %430 = vmatprep.subr.mxu0 0.0
    %431 = vmatpush2.msra.mxu0 0.0
    %432 = vmatprep.subr.mxu0 0.0
    %433 = vmatpush2.msra.mxu0 0.0
    %434 = vmatprep.subr.mxu0 0.0
    %435 = vmatpush2.msra.mxu0 0.0
    %436 = vmatprep.subr.mxu0 0.0
    %437 = vmatpush2.msra.mxu0 0.0
    %438 = vmatprep.subr.mxu0 0.0
    %439 = vmatpush2.msra.mxu0 0.0
    %440 = vmatprep.subr.mxu0 0.0
    %441 = vmatpush2.msra.mxu0 0.0
    %442 = vmatprep.subr.mxu0 0.0
    %443 = vmatpush2.msra.mxu0 0.0
    %444 = vmatprep.subr.mxu0 0.0
    %445 = vmatpush2.msra.mxu0 0.0
    %446 = vmatprep.subr.mxu0 0.0
    %447 = vmatpush2.msra.mxu0 0.0
    %448 = vmatprep.subr.mxu0 0.0
    %449 = vmatpush2.msra.mxu0 0.0
    %450 = vmatprep.subr.mxu0 0.0
    %451 = vmatpush2.msra.mxu0 0.0
    %452 = vmatprep.subr.mxu0 0.0
    %453 = vmatpush2.msra.mxu0 0.0
    %454 = vmatprep.subr.mxu0 0.0
    %455 = vmatpush2.msra.mxu0 0.0
    %456 = vmatprep.subr.mxu0 0.0
    %457 = vmatpush2.msra.mxu0 0.0
    %458 = vmatprep.mubr.f32.mxu0 0.0
    %459 = vmatmul.mubr.f32.gmra.mxu0 %v375
    %v460 = vpop.f32.mrf.mxu0
    %v461 = vadd.f32 0.0, %v460
    %v462 = vpop.f32.mrf.mxu0
    %463 = vdwg.mxu0
    %v464 = vadd.f32 %v377, %v461
    %465 = vmax.xlane.f32.xlu0 %v464
    %v466 = vpop.xlane.xlu0 %465
    %v467 = vsub.f32 %v464, %v466
    %v468 = vmul.f32 %v467, 1.442695
    %v469 = vpow.pop %v468
    %470 = vadd.xlane.f32.xlu0 %v469
    %v471 = vpop.xlane.xlu0 %470
    %v472 = vrcp.pop %v471
    %v473 = vmul.f32 %v469, %v472
    %474 = vst [vmem:[#allocation13] sm:$0xff] %v473
    // Predicated region
    $region38: #{tpu_custom_call.1} parent=1 // pred_check
      _
    $region39: #{tpu_custom_call.1} parent=1 // pred_check_branch
      %476 = sbr.rel (0) target = $region41
    $region40: #{tpu_custom_call.1} parent=1 // pred_region
      %s478 = ssub.s32 128, 128
      %479 = vsyncadd [#allocation4], %s478
      %s481 = sshll.u32 [#allocation10], 4
      %s482 = int_to_ptr.vmem [resolvable:$true] %s481
      %484 = dma.vmem_to_hbm [thread:$0]  %s482, 128, %s5, [#allocation4]
    $region41: #{tpu_custom_call.1} parent=1 // pred_fallthru
      _
    // Predicated region
    $region42: #{tpu_custom_call.1} parent=1 // pred_check
      _
    $region43: #{tpu_custom_call.1} parent=1 // pred_check_branch
      %486 = sbr.rel (0) target = $region45
    $region44: #{tpu_custom_call.1} parent=1 // pred_region
      %s488 = ssub.s32 128, 128
      %489 = vsyncadd [#allocation12], %s488
      %s491 = sshll.u32 [#allocation11], 4
      %s492 = int_to_ptr.vmem [resolvable:$true] %s491
      %494 = dma.vmem_to_hbm [thread:$0]  %s492, 128, %s6, [#allocation12]
    $region45: #{tpu_custom_call.1} parent=1 // pred_fallthru
      _
    // Predicated region
    $region46: #{tpu_custom_call.1} parent=1 // pred_check
      _
    $region47: #{tpu_custom_call.1} parent=1 // pred_check_branch
      %496 = sbr.rel (0) target = $region49
    $region48: #{tpu_custom_call.1} parent=1 // pred_region
      %s498 = ssub.s32 128, 128
      %499 = vsyncadd [#allocation12], %s498
      %s501 = sshll.u32 [#allocation13], 4
      %s502 = int_to_ptr.vmem [resolvable:$true] %s501
      %504 = dma.vmem_to_hbm [thread:$0]  %s502, 128, %s7, [#allocation12]
    $region49: #{tpu_custom_call.1} parent=1 // pred_fallthru
      _
    // Predicated region
    $region50: #{tpu_custom_call.1} parent=1 // pred_check
      _
    $region51: #{tpu_custom_call.1} parent=1 // pred_check_branch
      %506 = sbr.rel (0) target = $region53
    $region52: #{tpu_custom_call.1} parent=1 // pred_region
      %507 = dma.done [#allocation4], 128
    $region53: #{tpu_custom_call.1} parent=1 // pred_fallthru
      _
    // Predicated region
    $region54: #{tpu_custom_call.1} parent=1 // pred_check
      _
    $region55: #{tpu_custom_call.1} parent=1 // pred_check_branch
      %509 = sbr.rel (0) target = $region57
    $region56: #{tpu_custom_call.1} parent=1 // pred_region
      %510 = dma.done [#allocation12], 128
    $region57: #{tpu_custom_call.1} parent=1 // pred_fallthru
      _
    // Predicated region
    $region58: #{tpu_custom_call.1} parent=1 // pred_check
      _
    $region59: #{tpu_custom_call.1} parent=1 // pred_check_branch
      %512 = sbr.rel (0) target = $region61
    $region60: #{tpu_custom_call.1} parent=1 // pred_region
      %513 = dma.done [#allocation12], 128
    $region61: #{tpu_custom_call.1} parent=1 // pred_fallthru
      _
    %514 = vsyncpa [#allocation3], 1
    %515 = vsyncpa [#allocation6], 1
    %516 = vsyncpa [#allocation9], 1
    %517 = vsyncpa [#allocation4], 1
    %518 = vsyncpa [#allocation12], 1

</llo_original>
